<compile_context>
chip_gen: v5e
topology: v5e:2x2
jax: 0.10.0
libtpu: 0.0.40
codegen_flags: <defaults>
</compile_context>

<pallas_src>
import functools

import numpy as np

import jax
import jax.numpy as jnp
from jax.experimental import pallas as pl
from jax.experimental.pallas import tpu as pltpu


# ------------------------------ Pallas kernel --------------------------------

def _make_mlp_kernel(n_linear: int):
    """Fused (effective-first-Linear + tail MLP) over one batch tile.

    Ref layout (per grid step over batch tiles):
      x_ref   : (tb, N*T)  flattened input, matmul dtype
      layers  : w_1 (N*T, W), b_1 (1, W), w_2, b_2, ..., w_L, b_L
                (last weight/bias zero-padded to a lane-dense width)
      o_ref   : (tb, T_pad) float32
    """

    def kernel(x_ref, *rest):
        o_ref = rest[-1]
        layers = rest[:-1]

        h = x_ref[...]
        for li in range(n_linear):
            w = layers[2 * li][...]
            b = layers[2 * li + 1][...]
            # f32 accumulation on the MXU; bias add + ReLU in f32 on the VPU.
            h = jnp.dot(h.astype(w.dtype), w,
                        preferred_element_type=jnp.float32) + b
            if li < n_linear - 1:
                h = jnp.maximum(h, 0.0)

        o_ref[...] = h.astype(o_ref.dtype)          # unmasked lane-dense store

    return kernel


# ----------------------------- tiling / VMEM ----------------------------------

def _vmem_limit_bytes() -> int:
    """Generation-aware VMEM limit: physical capacity minus ~16 MiB headroom."""
    mib = 1024 * 1024
    try:
        cap = int(pltpu.get_tpu_info().vmem_capacity_bytes)
    except Exception:                                  # query unavailable
        cap = 64 * mib
    return int(max(32 * mib, min(cap - 16 * mib, 112 * mib)))


def _batch_tile(batch: int, per_row_bytes: int, resident_bytes: int,
                vmem_budget: int) -> int:
    """Largest multiple-of-8 divisor of `batch` that (a) fits the VMEM budget
    together with the resident (single-buffered) weights and (b) leaves
    nb >= 2 for batch >= 16 so v7x's two TensorCores both get work and the
    batch-tile DMA overlaps compute."""
    if batch <= 8:
        return batch
    rows_by_vmem = max(8, (vmem_budget - resident_bytes) // max(per_row_bytes, 1))
    cap = batch // 2 if batch >= 16 else batch
    limit = min(cap, rows_by_vmem)
    for cand in (1024, 512, 256, 128, 64, 32, 16, 8):
        if cand <= limit and batch % cand == 0:
            return cand
    return batch               # odd batch size: single full-batch block


# --------------------------------- wrapper ------------------------------------

def neural_network_forward(recording_index, recording_X, params,
                           *, matmul_dtype=jnp.float32):
    """recording_index must be a static Python int (mirrors PyTorch list indexing).

    matmul_dtype: dtype fed to the MXU (x / weights); accumulation is always
    float32.  Use jnp.bfloat16 at production widths for ~2x MXU rate and half
    the DMA traffic (self-check tolerance must then be loosened).
    """
    U = params["Us"][recording_index]            # (N, R)
    bias = params["biases"][recording_index]     # (R, T)
    mlp = params["mlp"]                          # [(w: (in, out), b: (out,)), ...]

    B, N, T = recording_X.shape
    R = U.shape[1]
    n_linear = len(mlp)
    w1, b1 = mlp[0]
    width = w1.shape[1]
    t_out = mlp[-1][0].shape[1]
    t_pad = pl.cdiv(t_out, 128) * 128            # lane-dense output slab width
    nt = N * T

    # ---- fold projection + flatten into the first Linear (wrapper side) -----
    #   A[n*T+t, w] = sum_r U[n,r] * W1[r*T+t, w]
    #   c[w]        = sum_{r,t} bias[r,t] * W1[r*T+t, w]
    hi = jax.lax.Precision.HIGHEST
    w1_3d = w1.reshape(R, T, width).astype(jnp.float32)
    A = jnp.einsum("nr,rtw->ntw", U.astype(jnp.float32), w1_3d,
                   precision=hi).reshape(nt, width)
    c = jnp.einsum("rt,rtw->w", bias.astype(jnp.float32), w1_3d, precision=hi)
    b1_eff = (b1.astype(jnp.float32) + c).reshape(1, width)

    # Free row-major reshape (B, N, T) -> (B, N*T); no transpose, no extra HBM pass.
    x_flat = recording_X.reshape(B, nt).astype(matmul_dtype)

    layers = [A.astype(matmul_dtype), b1_eff]
    for li in range(1, n_linear):
        w, b = mlp[li]
        w = w.astype(matmul_dtype)
        b2 = b.reshape(1, -1).astype(jnp.float32)
        if li == n_linear - 1:                   # zero-pad final layer to lane width
            w = jnp.pad(w, ((0, 0), (0, t_pad - t_out)))
            b2 = jnp.pad(b2, ((0, 0), (0, t_pad - t_out)))
        layers.append(w)
        layers.append(b2)
    # TODO(synk): at production widths (W >= ~2048), additionally tile each
    # Linear over its output dim (and over K for the first layer) with a VMEM
    # f32 accumulator + an "arbitrary" reduction grid axis, instead of keeping
    # every full (W, W) weight simultaneously VMEM-resident.  Optionally store
    # tail weights in fp8 on v7x.

    # ---- VMEM-aware batch tiling --------------------------------------------
    in_bytes = np.dtype(matmul_dtype).itemsize
    resident = sum(int(a.size) * int(a.dtype.itemsize) for a in layers)
    per_row = (2 * nt * in_bytes                 # double-buffered x block
               + 2 * t_pad * 4                   # double-buffered f32 output block
               + 4 * max(width, t_pad) * 4)      # activation temporaries (rough)
    vmem_limit = _vmem_limit_bytes()
    tb = _batch_tile(B, per_row, resident, vmem_limit)
    nb = B // tb

    # ---- specs ----------------------------------------------------------------
    def _const_spec(shape):
        idx = lambda i: (0,) * len(shape)
        try:            # single-buffer grid-invariant operands (don't double weights)
            return pl.BlockSpec(shape, idx, pipeline_mode=pl.Buffered(1))
        except TypeError:
            return pl.BlockSpec(shape, idx)

    in_specs = [pl.BlockSpec((tb, nt), lambda i: (i, 0))]        # batch-tiled x
    in_specs += [_const_spec(a.shape) for a in layers]
    # TODO(synk): sweep pipeline_mode=pl.Buffered(3) on the x spec (input-DMA-bound
    # regime) once weights are single-buffered; revert if VMEM-tight on v7x.

    flops = 2 * B * (nt * width
                     + max(n_linear - 2, 0) * width * width
                     + width * t_pad)
    bytes_accessed = B * nt * in_bytes + resident + B * t_pad * 4

    out = pl.pallas_call(
        _make_mlp_kernel(n_linear),
        out_shape=jax.ShapeDtypeStruct((B, t_pad), jnp.float32),
        grid_spec=pltpu.PrefetchScalarGridSpec(
            num_scalar_prefetch=0,
            grid=(nb,),
            in_specs=in_specs,
            out_specs=pl.BlockSpec((tb, t_pad), lambda i: (i, 0)),
        ),
        compiler_params=pltpu.CompilerParams(
            dimension_semantics=("parallel",),   # batch tiles shard across TCs
            vmem_limit_bytes=vmem_limit,
        ),
        cost_estimate=pl.CostEstimate(
            flops=int(flops),
            transcendentals=0,
            bytes_accessed=int(bytes_accessed)),
    )(x_flat, *layers)

    return out[:, :t_out]                        # drop lane padding


# ---------------------------- parameter creation ------------------------------

def init_params(key, n_recordings, n_neurons_per_recording, n_time_bins,
                width, hidden_layers, rank):
    keys = iter(jax.random.split(key, 4 * n_recordings + 4 * (hidden_layers + 1)))
    Us = [jax.random.normal(next(keys), (n_neurons_per_recording[i], rank),
                            dtype=jnp.float32)
          for i in range(n_recordings)]
    biases = [jax.random.normal(next(keys), (rank, n_time_bins),
                                dtype=jnp.float32)
              for _ in range(n_recordings)]
    # MLP layer shapes: (rank*T -> width), (width -> width)*(H-1), (width -> T)
    # Weights stored as (in, out) == PyTorch weight.T
    dims = [rank * n_time_bins] + [width] * hidden_layers + [n_time_bins]
    mlp = []
    for d_in, d_out in zip(dims[:-1], dims[1:]):
        w = jax.random.normal(next(keys), (d_in, d_out), dtype=jnp.float32) * 0.1
        b = jax.random.normal(next(keys), (d_out,), dtype=jnp.float32) * 0.1
        mlp.append((w, b))
    return {"Us": Us, "biases": biases, "mlp": mlp}


# ---------------------------- pure-JAX reference ------------------------------

def reference_forward(recording_index, x, params):
    U = params["Us"][recording_index]
    bias = params["biases"][recording_index]
    proj = jnp.einsum("nr,bnt->brt", U, x) + bias[None]
    h = proj.reshape(x.shape[0], -1)
    n = len(params["mlp"])
    for i, (w, b) in enumerate(params["mlp"]):
        h = h @ w + b
        if i < n - 1:
            h = jnp.maximum(h, 0.0)
    return h


# ------------------------------------ main ------------------------------------

if __name__ == "__main__":
    # Small deterministic config consistent with the module's __init__.
    n_recordings = 2
    n_neurons_per_recording = [6, 5]
    n_time_bins = 8
    width = 32
    hidden_layers = 2
    rank = 4
    batch = 2
    recording_index = 1  # static python int, selects Us[1]/biases[1]

    key = jax.random.PRNGKey(0)
    pkey, xkey = jax.random.split(key)
    params = init_params(pkey, n_recordings, n_neurons_per_recording,
                         n_time_bins, width, hidden_layers, rank)

    x = jax.random.normal(
        xkey, (batch, n_neurons_per_recording[recording_index], n_time_bins),
        dtype=jnp.float32)

    y_ref = reference_forward(recording_index, x, params)

    # f32 MXU operands: tight self-check.
    fwd_f32 = jax.jit(functools.partial(neural_network_forward, recording_index,
                                        matmul_dtype=jnp.float32))
    y = jax.block_until_ready(fwd_f32(x, params))
    assert y.shape == (batch, n_time_bins), y.shape
    assert jnp.allclose(y, y_ref, atol=1e-4, rtol=1e-4), (
        float(jnp.max(jnp.abs(y - y_ref))))

    # bf16 MXU operands (production setting): looser tolerance, f32 accumulation.
    fwd_bf16 = jax.jit(functools.partial(neural_network_forward, recording_index,
                                         matmul_dtype=jnp.bfloat16))
    y_bf16 = jax.block_until_ready(fwd_bf16(x, params))
    assert y_bf16.shape == (batch, n_time_bins), y_bf16.shape
    assert jnp.allclose(y_bf16, y_ref, atol=5e-2, rtol=5e-2), (
        float(jnp.max(jnp.abs(y_bf16 - y_ref))))

    print("KERNEL_OK")
</pallas_src>

<mosaic_0001>
module attributes {stable_mosaic.version = 11 : i64} {
  func.func @kernel(%arg0: i32, %arg1: memref<2x40xf32, #tpu.memory_space<vmem>>, %arg2: memref<40x32xf32, #tpu.memory_space<vmem>>, %arg3: memref<1x32xf32, #tpu.memory_space<vmem>>, %arg4: memref<32x32xf32, #tpu.memory_space<vmem>>, %arg5: memref<1x32xf32, #tpu.memory_space<vmem>>, %arg6: memref<32x128xf32, #tpu.memory_space<vmem>>, %arg7: memref<1x128xf32, #tpu.memory_space<vmem>>, %arg8: memref<2x128xf32, #tpu.memory_space<vmem>>) attributes {dimension_semantics = [#tpu.dimension_semantics<parallel>], iteration_bounds = array<i64: 1>, scalar_prefetch = 0 : i64, scratch_operands = 0 : i64, tpu.core_type = #tpu.core_type<tc>, window_params = [{transform_indices = @transform_0, window_bounds = array<i64: 2, 40>}, {pipeline_mode = #tpu.pipeline_mode<synchronous>, transform_indices = @transform_1, window_bounds = array<i64: 40, 32>}, {pipeline_mode = #tpu.pipeline_mode<synchronous>, transform_indices = @transform_2, window_bounds = array<i64: 1, 32>}, {pipeline_mode = #tpu.pipeline_mode<synchronous>, transform_indices = @transform_3, window_bounds = array<i64: 32, 32>}, {pipeline_mode = #tpu.pipeline_mode<synchronous>, transform_indices = @transform_4, window_bounds = array<i64: 1, 32>}, {pipeline_mode = #tpu.pipeline_mode<synchronous>, transform_indices = @transform_5, window_bounds = array<i64: 32, 128>}, {pipeline_mode = #tpu.pipeline_mode<synchronous>, transform_indices = @transform_6, window_bounds = array<i64: 1, 128>}, {transform_indices = @transform_7, window_bounds = array<i64: 2, 128>}]} {
    %c0 = arith.constant 0 : index
    %c0_0 = arith.constant 0 : index
    %0 = vector.load %arg1[%c0, %c0_0] : memref<2x40xf32, #tpu.memory_space<vmem>>, vector<2x40xf32>
    %c0_1 = arith.constant 0 : index
    %c0_2 = arith.constant 0 : index
    %1 = vector.load %arg2[%c0_1, %c0_2] : memref<40x32xf32, #tpu.memory_space<vmem>>, vector<40x32xf32>
    %c0_3 = arith.constant 0 : index
    %c0_4 = arith.constant 0 : index
    %2 = vector.load %arg3[%c0_3, %c0_4] : memref<1x32xf32, #tpu.memory_space<vmem>>, vector<1x32xf32>
    %cst = arith.constant dense<0.000000e+00> : vector<2x32xf32>
    %3 = tpu.matmul %0, %1, %cst {dimension_numbers = #tpu.dot_dimension_numbers<[1], [0], [0], [1], [0, 0, 1, 1], [], []>} : vector<2x40xf32>, vector<40x32xf32>, vector<2x32xf32> -> vector<2x32xf32>
    %4 = vector.broadcast %2 : vector<1x32xf32> to vector<2x32xf32>
    %5 = arith.addf %3, %4 : vector<2x32xf32>
    %cst_5 = arith.constant 0.000000e+00 : f32
    %6 = vector.broadcast %cst_5 : f32 to vector<2x32xf32>
    %7 = arith.maximumf %5, %6 : vector<2x32xf32>
    %c0_6 = arith.constant 0 : index
    %c0_7 = arith.constant 0 : index
    %8 = vector.load %arg4[%c0_6, %c0_7] : memref<32x32xf32, #tpu.memory_space<vmem>>, vector<32x32xf32>
    %c0_8 = arith.constant 0 : index
    %c0_9 = arith.constant 0 : index
    %9 = vector.load %arg5[%c0_8, %c0_9] : memref<1x32xf32, #tpu.memory_space<vmem>>, vector<1x32xf32>
    %cst_10 = arith.constant dense<0.000000e+00> : vector<2x32xf32>
    %10 = tpu.matmul %7, %8, %cst_10 {dimension_numbers = #tpu.dot_dimension_numbers<[1], [0], [0], [1], [0, 0, 1, 1], [], []>} : vector<2x32xf32>, vector<32x32xf32>, vector<2x32xf32> -> vector<2x32xf32>
    %11 = vector.broadcast %9 : vector<1x32xf32> to vector<2x32xf32>
    %12 = arith.addf %10, %11 : vector<2x32xf32>
    %cst_11 = arith.constant 0.000000e+00 : f32
    %13 = vector.broadcast %cst_11 : f32 to vector<2x32xf32>
    %14 = arith.maximumf %12, %13 : vector<2x32xf32>
    %c0_12 = arith.constant 0 : index
    %c0_13 = arith.constant 0 : index
    %15 = vector.load %arg6[%c0_12, %c0_13] : memref<32x128xf32, #tpu.memory_space<vmem>>, vector<32x128xf32>
    %c0_14 = arith.constant 0 : index
    %c0_15 = arith.constant 0 : index
    %16 = vector.load %arg7[%c0_14, %c0_15] : memref<1x128xf32, #tpu.memory_space<vmem>>, vector<1x128xf32>
    %cst_16 = arith.constant dense<0.000000e+00> : vector<2x128xf32>
    %17 = tpu.matmul %14, %15, %cst_16 {dimension_numbers = #tpu.dot_dimension_numbers<[1], [0], [0], [1], [0, 0, 1, 1], [], []>} : vector<2x32xf32>, vector<32x128xf32>, vector<2x128xf32> -> vector<2x128xf32>
    %18 = vector.broadcast %16 : vector<1x128xf32> to vector<2x128xf32>
    %19 = arith.addf %17, %18 : vector<2x128xf32>
    %c0_17 = arith.constant 0 : index
    %c0_18 = arith.constant 0 : index
    %20 = vector.load %arg8[%c0_17, %c0_18] : memref<2x128xf32, #tpu.memory_space<vmem>>, vector<2x128xf32>
    tpu.vector_store %arg8[%c0_17, %c0_18], %19 {strides = array<i32>} : memref<2x128xf32, #tpu.memory_space<vmem>>, vector<2x128xf32>,
    return
  }
  func.func @transform_0(%arg0: i32) -> (i32, i32) {
    %c0_i32 = arith.constant 0 : i32
    %c0_i32_0 = arith.constant 0 : i32
    return %arg0, %c0_i32 : i32, i32
  }
  func.func @transform_1(%arg0: i32) -> (i32, i32) {
    %c0_i32 = arith.constant 0 : i32
    %c0_i32_0 = arith.constant 0 : i32
    %c0_i32_1 = arith.constant 0 : i32
    return %c0_i32, %c0_i32_0 : i32, i32
  }
  func.func @transform_2(%arg0: i32) -> (i32, i32) {
    %c0_i32 = arith.constant 0 : i32
    %c0_i32_0 = arith.constant 0 : i32
    %c0_i32_1 = arith.constant 0 : i32
    return %c0_i32, %c0_i32_0 : i32, i32
  }
  func.func @transform_3(%arg0: i32) -> (i32, i32) {
    %c0_i32 = arith.constant 0 : i32
    %c0_i32_0 = arith.constant 0 : i32
    %c0_i32_1 = arith.constant 0 : i32
    return %c0_i32, %c0_i32_0 : i32, i32
  }
  func.func @transform_4(%arg0: i32) -> (i32, i32) {
    %c0_i32 = arith.constant 0 : i32
    %c0_i32_0 = arith.constant 0 : i32
    %c0_i32_1 = arith.constant 0 : i32
    return %c0_i32, %c0_i32_0 : i32, i32
  }
  func.func @transform_5(%arg0: i32) -> (i32, i32) {
    %c0_i32 = arith.constant 0 : i32
    %c0_i32_0 = arith.constant 0 : i32
    %c0_i32_1 = arith.constant 0 : i32
    return %c0_i32, %c0_i32_0 : i32, i32
  }
  func.func @transform_6(%arg0: i32) -> (i32, i32) {
    %c0_i32 = arith.constant 0 : i32
    %c0_i32_0 = arith.constant 0 : i32
    %c0_i32_1 = arith.constant 0 : i32
    return %c0_i32, %c0_i32_0 : i32, i32
  }
  func.func @transform_7(%arg0: i32) -> (i32, i32) {
    %c0_i32 = arith.constant 0 : i32
    %c0_i32_0 = arith.constant 0 : i32
    return %arg0, %c0_i32 : i32, i32
  }
}

</mosaic_0001>

<llo_original>
// kernel: neural_network_forward.1
$region0: #{neural_network_forward.1}
  #allocation0 [shape = 'u32[]', space=smem, size = 0x4, offset = 0x4, fixed_abs, tag = 'smem constant byte address 0x4 - core index']
  #allocation1 [shape = 'u32[72,128]{1,0:T(1,128)}', space=vmem, size = 0x9000, scoped, tag = 'internal scratch']
  %s0 = inlined_call_operand.vmem [shape: f32[2,40], index: 0, kind: input, shape index: {}]
  %s1 = inlined_call_operand.vmem [shape: f32[40,32], index: 1, kind: input, shape index: {}]
  %s2 = inlined_call_operand.vmem [shape: f32[1,32], index: 2, kind: input, shape index: {}]
  %s3 = inlined_call_operand.vmem [shape: f32[32,32], index: 3, kind: input, shape index: {}]
  %s4 = inlined_call_operand.vmem [shape: f32[1,32], index: 4, kind: input, shape index: {}]
  %s5 = inlined_call_operand.vmem [shape: f32[32,128], index: 5, kind: input, shape index: {}]
  %s6 = inlined_call_operand.vmem [shape: f32[1,128], index: 6, kind: input, shape index: {}]
  %s7 = inlined_call_operand.hbm [shape: f32[2,128], index: 7, kind: output, shape index: {}]
  %s8 = sld [smem:[#allocation0]]
  $region38: #{neural_network_forward.1} parent=0
    _
  %s10 = ssub.s32 1, %s8
  %s11 = scalar_select 0, %s10, %s8
  $region1: #{neural_network_forward.1} parent=0
    #allocation2 [shape = 'u8[1024]{0}', space=vmem, size = 0x400, scoped, tag = 'output window, operand 0, single buffered']
    #allocation3 [shape = 's32[1]{0}', space=sflag, size = 0x4, scoped, tag = 'scoped memory for neural_network_forward.1']
    %12 = vsyncpa [#allocation3], 0
    // Predicated region
    $region2: #{neural_network_forward.1} parent=1 // pred_check
      _
    $region3: #{neural_network_forward.1} parent=1 // pred_check_branch
      %14 = sbr.rel (0) target = $region5
    $region4: #{neural_network_forward.1} parent=1 // pred_region
      _
    $region5: #{neural_network_forward.1} parent=1 // pred_fallthru
      _
    // Predicated region
    $region6: #{neural_network_forward.1} parent=1 // pred_check
      _
    $region7: #{neural_network_forward.1} parent=1 // pred_check_branch
      %16 = sbr.rel (0) target = $region9
    $region8: #{neural_network_forward.1} parent=1 // pred_region
      _
    $region9: #{neural_network_forward.1} parent=1 // pred_fallthru
      _
    // Predicated region
    $region10: #{neural_network_forward.1} parent=1 // pred_check
      _
    $region11: #{neural_network_forward.1} parent=1 // pred_check_branch
      %18 = sbr.rel (0) target = $region13
    $region12: #{neural_network_forward.1} parent=1 // pred_region
      _
    $region13: #{neural_network_forward.1} parent=1 // pred_fallthru
      _
    // Predicated region
    $region14: #{neural_network_forward.1} parent=1 // pred_check
      _
    $region15: #{neural_network_forward.1} parent=1 // pred_check_branch
      %20 = sbr.rel (0) target = $region17
    $region16: #{neural_network_forward.1} parent=1 // pred_region
      _
    $region17: #{neural_network_forward.1} parent=1 // pred_fallthru
      _
    // Predicated region
    $region18: #{neural_network_forward.1} parent=1 // pred_check
      _
    $region19: #{neural_network_forward.1} parent=1 // pred_check_branch
      %22 = sbr.rel (0) target = $region21
    $region20: #{neural_network_forward.1} parent=1 // pred_region
      _
    $region21: #{neural_network_forward.1} parent=1 // pred_fallthru
      _
    // Predicated region
    $region22: #{neural_network_forward.1} parent=1 // pred_check
      _
    $region23: #{neural_network_forward.1} parent=1 // pred_check_branch
      %24 = sbr.rel (0) target = $region25
    $region24: #{neural_network_forward.1} parent=1 // pred_region
      _
    $region25: #{neural_network_forward.1} parent=1 // pred_fallthru
      _
    // Predicated region
    $region26: #{neural_network_forward.1} parent=1 // pred_check
      _
    $region27: #{neural_network_forward.1} parent=1 // pred_check_branch
      %26 = sbr.rel (0) target = $region29
    $region28: #{neural_network_forward.1} parent=1 // pred_region
      _
    $region29: #{neural_network_forward.1} parent=1 // pred_fallthru
      _
    %v27 = vld [vmem:[%s0] sm:$0x3]
    %v28 = vld [vmem:[%s1] sm:$0xff]
    %v29 = vld [vmem:[%s1 + $0x8] sm:$0xff]
    %v30 = vld [vmem:[%s1 + $0x10] sm:$0xff]
    %v31 = vld [vmem:[%s1 + $0x18] sm:$0xff]
    %v32 = vld [vmem:[%s1 + $0x20] sm:$0xff]
    %v33 = vld [vmem:[%s2] sm:$0x1]
    %v35 = vperm.slane %v33, 0
    %vm37 = vcmask 326656
    %v39 = vsel %vm37, %v27, 0
    %41 = vmatpush.msra.mxu0 0.0
    %42 = vmatpush.msra.mxu0 0.0
    %43 = vmatpush.msra.mxu0 0.0
    %44 = vmatpush.msra.mxu0 0.0
    %45 = vmatpush.msra.mxu0 0.0
    %46 = vmatpush.msra.mxu0 0.0
    %47 = vmatpush.msra.mxu0 0.0
    %48 = vmatpush.msra.mxu0 0.0
    %49 = vmatpush.msra.mxu0 0.0
    %50 = vmatpush.msra.mxu0 0.0
    %51 = vmatpush.msra.mxu0 0.0
    %52 = vmatpush.msra.mxu0 %v32
    %53 = vmatpush.msra.mxu0 %v31
    %54 = vmatpush.msra.mxu0 %v30
    %55 = vmatpush.msra.mxu0 %v29
    %56 = vmatpush.msra.mxu0 %v28
    %57 = vmatmul.f32.gmra.mxu0 %v39
    %v58 = vpop.f32.mrf.mxu0
    %v59 = vadd.f32 %v35, %v58
    %60 = vdwg.mxu0
    %v61 = vmax.f32 %v59, 0.0
    %v62 = vld [vmem:[%s3] sm:$0xff]
    %v63 = vld [vmem:[%s3 + $0x8] sm:$0xff]
    %v64 = vld [vmem:[%s3 + $0x10] sm:$0xff]
    %v65 = vld [vmem:[%s3 + $0x18] sm:$0xff]
    %v66 = vld [vmem:[%s4] sm:$0x1]
    %v68 = vperm.slane %v66, 0
    %vm70 = vcmask 261120
    %v72 = vsel %vm70, %v61, 0
    %74 = vmatpush.msra.mxu0 0.0
    %75 = vmatpush.msra.mxu0 0.0
    %76 = vmatpush.msra.mxu0 0.0
    %77 = vmatpush.msra.mxu0 0.0
    %78 = vmatpush.msra.mxu0 0.0
    %79 = vmatpush.msra.mxu0 0.0
    %80 = vmatpush.msra.mxu0 0.0
    %81 = vmatpush.msra.mxu0 0.0
    %82 = vmatpush.msra.mxu0 0.0
    %83 = vmatpush.msra.mxu0 0.0
    %84 = vmatpush.msra.mxu0 0.0
    %85 = vmatpush.msra.mxu0 0.0
    %86 = vmatpush.msra.mxu0 %v65
    %87 = vmatpush.msra.mxu0 %v64
    %88 = vmatpush.msra.mxu0 %v63
    %89 = vmatpush.msra.mxu0 %v62
    %90 = vmatmul.f32.gmra.mxu0 %v72
    %v91 = vpop.f32.mrf.mxu0
    %v92 = vadd.f32 %v68, %v91
    %93 = vdwg.mxu0
    %v94 = vmax.f32 %v92, 0.0
    %v95 = vld [vmem:[%s5] sm:$0xff]
    %v96 = vld [vmem:[%s5 + $0x8] sm:$0xff]
    %v97 = vld [vmem:[%s5 + $0x10] sm:$0xff]
    %v98 = vld [vmem:[%s5 + $0x18] sm:$0xff]
    %v99 = vld [vmem:[%s6] sm:$0x1]
    %v101 = vperm.slane %v99, 0
    %v104 = vsel %vm70, %v94, 0
    %106 = vmatpush.msra.mxu0 0.0
    %107 = vmatpush.msra.mxu0 0.0
    %108 = vmatpush.msra.mxu0 0.0
    %109 = vmatpush.msra.mxu0 0.0
    %110 = vmatpush.msra.mxu0 0.0
    %111 = vmatpush.msra.mxu0 0.0
    %112 = vmatpush.msra.mxu0 0.0
    %113 = vmatpush.msra.mxu0 0.0
    %114 = vmatpush.msra.mxu0 0.0
    %115 = vmatpush.msra.mxu0 0.0
    %116 = vmatpush.msra.mxu0 0.0
    %117 = vmatpush.msra.mxu0 0.0
    %118 = vmatpush.msra.mxu0 %v98
    %119 = vmatpush.msra.mxu0 %v97
    %120 = vmatpush.msra.mxu0 %v96
    %121 = vmatpush.msra.mxu0 %v95
    %122 = vmatmul.f32.gmra.mxu0 %v104
    %v123 = vpop.f32.mrf.mxu0
    %v124 = vadd.f32 %v101, %v123
    %125 = vdwg.mxu0
    %126 = vst [vmem:[#allocation2] sm:$0x3] %v124
    // Predicated region
    $region30: #{neural_network_forward.1} parent=1 // pred_check
      _
    $region31: #{neural_network_forward.1} parent=1 // pred_check_branch
      %128 = sbr.rel (0) target = $region33
    $region32: #{neural_network_forward.1} parent=1 // pred_region
      %130 = vsyncadd [#allocation3], 0
      %s132 = sshll.u32 [#allocation2], 4
      %s133 = int_to_ptr.vmem [resolvable:$true] %s132
      %s134 = sshll.u32 %s7, 4
      %s135 = int_to_ptr.hbm [resolvable:$true] %s134
      %137 = dma.vmem_to_hbm [thread:$0]  %s133, 32, %s135, [#allocation3]
    $region33: #{neural_network_forward.1} parent=1 // pred_fallthru
      _
    // Predicated region
    $region34: #{neural_network_forward.1} parent=1 // pred_check
      _
    $region35: #{neural_network_forward.1} parent=1 // pred_check_branch
      %139 = sbr.rel (0) target = $region37
    $region36: #{neural_network_forward.1} parent=1 // pred_region
      %141 = dma.done [#allocation3], 32
    $region37: #{neural_network_forward.1} parent=1 // pred_fallthru
      _
    %142 = vsyncpa [#allocation3], 1

</llo_original>
